<compile_context>
chip_gen: v7x
topology: tpu7x:2x2x1
jax: 0.10.0
libtpu: 0.0.40
codegen_flags: <defaults>
</compile_context>

<pallas_src>
import jax
import jax.numpy as jnp
from jax.experimental import pallas as pl
from jax.experimental.pallas import tpu as pltpu

LANE = 128   # TPU lane width: batch tiles are multiples of this.
SUB = 8      # f32 sublane tile: feature dims are padded to multiples of this.


def _round_up(x, m):
    return ((x + m - 1) // m) * m


def _softplus(x):
    # Numerically stable softplus, matches F.softplus (beta=1).  exp/log1p go
    # to the EUP slot, off the VALU/MXU critical path.
    # TODO(synk): on v6e/v7x the transcendentals could run in bf16 for ~2x EUP
    # throughput (~1e-3 rel error in the logits); kept f32 to match PyTorch.
    return jnp.maximum(x, 0.0) + jnp.log1p(jnp.exp(-jnp.abs(x)))


def _packed_layout(n_in_p, h1, h2, n_act_p):
    """Column offsets of [w1 | b1 | w2 | b2 | w3 | b3] in the packed array."""
    c_w1 = 0
    c_b1 = c_w1 + n_in_p
    c_w2 = c_b1 + 1
    c_b2 = c_w2 + h1
    c_w3 = c_b2 + 1
    c_b3 = c_w3 + h2
    return dict(c_w1=c_w1, c_b1=c_b1, c_w2=c_w2, c_b2=c_b2, c_w3=c_w3,
                c_b3=c_b3, n_cols=c_b3 + 1, n_rows=max(h1, h2, n_act_p))


def pack_params(params):
    """Zero-pad + pack the six PyTorch-layout weight/bias arrays into one small
    resident array (single BlockSpec / single DMA at kernel start)."""
    w1, b1 = params["w1"], params["b1"]
    w2, b2 = params["w2"], params["b2"]
    w3, b3 = params["w3"], params["b3"]
    h1, n_in = w1.shape
    h2 = w2.shape[0]
    n_act = w3.shape[0]
    assert h1 % SUB == 0 and h2 % SUB == 0, "hidden widths must be multiples of 8"
    n_in_p = _round_up(n_in, SUB)
    n_act_p = _round_up(n_act, SUB)
    lay = _packed_layout(n_in_p, h1, h2, n_act_p)
    P = jnp.zeros((lay["n_rows"], lay["n_cols"]), jnp.float32)
    P = P.at[:h1, lay["c_w1"]:lay["c_w1"] + n_in].set(w1.astype(jnp.float32))
    P = P.at[:h1, lay["c_b1"]:lay["c_b1"] + 1].set(b1.astype(jnp.float32))
    P = P.at[:h2, lay["c_w2"]:lay["c_w2"] + h1].set(w2.astype(jnp.float32))
    P = P.at[:h2, lay["c_b2"]:lay["c_b2"] + 1].set(b2.astype(jnp.float32))
    P = P.at[:n_act, lay["c_w3"]:lay["c_w3"] + h2].set(w3.astype(jnp.float32))
    P = P.at[:n_act, lay["c_b3"]:lay["c_b3"] + 1].set(b3.astype(jnp.float32))
    dims = dict(n_in=n_in, n_in_p=n_in_p, h1=h1, h2=h2,
                n_act=n_act, n_act_p=n_act_p, **lay)
    return P, dims


def _make_kernel(n_in_p, h1, h2, n_act_p):
    lay = _packed_layout(n_in_p, h1, h2, n_act_p)
    c_w1, c_b1 = lay["c_w1"], lay["c_b1"]
    c_w2, c_b2 = lay["c_w2"], lay["c_b2"]
    c_w3, c_b3 = lay["c_w3"], lay["c_b3"]

    def kernel(x_ref, p_ref, o_ref):
        x = x_ref[...]                                     # [n_in_p, tb]
        P = p_ref[...]                                     # [n_rows, n_cols]
        w1 = P[:h1, c_w1:c_w1 + n_in_p]                    # [h1, n_in_p]
        b1 = P[:h1, c_b1:c_b1 + 1]                         # [h1, 1]
        w2 = P[:h2, c_w2:c_w2 + h1]                        # [h2, h1]
        b2 = P[:h2, c_b2:c_b2 + 1]
        w3 = P[:n_act_p, c_w3:c_w3 + h2]                   # [n_act_p, h2]
        b3 = P[:n_act_p, c_b3:c_b3 + 1]
        # All three contractions on the (otherwise idle) MXU; padded rows/cols
        # are zero so they contribute nothing.  Softplus stays on VPU/EUP.
        h = _softplus(jnp.dot(w1, x, preferred_element_type=jnp.float32) + b1)
        h = _softplus(jnp.dot(w2, h, preferred_element_type=jnp.float32) + b2)
        y = jnp.dot(w3, h, preferred_element_type=jnp.float32) + b3
        o_ref[...] = y.astype(o_ref.dtype)                 # [n_act_p, tb] lane-dense

    return kernel, lay


def _build_call(kernel, n_rows, n_cols, n_in_p, n_act_p, tb, pB, semantics,
                vmem_limit_bytes):
    return pl.pallas_call(
        kernel,
        out_shape=jax.ShapeDtypeStruct((n_act_p, pB), jnp.float32),
        grid=(pB // tb,),
        in_specs=[
            # Activations: tiled over the batch (lane) axis.
            pl.BlockSpec((n_in_p, tb), lambda i: (0, i)),
            # Packed weights/biases: same block every step -> resident in VMEM.
            pl.BlockSpec((n_rows, n_cols), lambda i: (0, 0)),
        ],
        out_specs=pl.BlockSpec((n_act_p, tb), lambda i: (0, i)),
        compiler_params=pltpu.CompilerParams(
            dimension_semantics=(semantics,),
            vmem_limit_bytes=vmem_limit_bytes),
    )


_CORE_PARALLEL_CACHE = {}


def _core_parallel_ok(kernel, n_rows, n_cols, n_in_p, n_act_p):
    """One-time probe: does this jax/chip accept CORE_PARALLEL grid semantics
    (and produce the same numbers as "arbitrary")?  Falls back cleanly if not."""
    key = (n_rows, n_cols, n_in_p, n_act_p)
    if key in _CORE_PARALLEL_CACHE:
        return _CORE_PARALLEL_CACHE[key]
    sem = getattr(pltpu, "CORE_PARALLEL", None)
    ok = False
    if sem is not None:
        try:
            x = jax.random.normal(jax.random.PRNGKey(42),
                                  (n_in_p, 2 * LANE), dtype=jnp.float32)
            p = jnp.linspace(-0.5, 0.5, n_rows * n_cols,
                             dtype=jnp.float32).reshape(n_rows, n_cols)
            out_cp = _build_call(kernel, n_rows, n_cols, n_in_p, n_act_p,
                                 LANE, 2 * LANE, sem, None)(x, p)
            out_rf = _build_call(kernel, n_rows, n_cols, n_in_p, n_act_p,
                                 LANE, 2 * LANE, "arbitrary", None)(x, p)
            ok = bool(jnp.allclose(jax.block_until_ready(out_cp), out_rf,
                                   atol=1e-5, rtol=1e-5))
        except Exception:
            ok = False
    _CORE_PARALLEL_CACHE[key] = ok
    return ok


def actor_forward_feature_major(xT, params, *, tb=4096):
    """Feature-major forward: xT is [n_inputs, B] -> logits [n_actions, B].

    Keeping observations feature-major end-to-end avoids the wrapper-side
    transpose HBM pass of the PyTorch [B, n_inputs] layout (see actor_forward).
    """
    P, d = pack_params(params)
    n_in, n_in_p = d["n_in"], d["n_in_p"]
    n_act, n_act_p = d["n_act"], d["n_act_p"]
    h1, h2 = d["h1"], d["h2"]
    n_rows, n_cols = d["n_rows"], d["n_cols"]
    B = xT.shape[1]
    assert xT.shape[0] == n_in

    kernel, _ = _make_kernel(n_in_p, h1, h2, n_act_p)

    # Batch tile: as large as the (128-rounded) batch, capped at `tb` lanes.
    # Big tiles amortize the ~0.35 us per-grid-step overhead and the tiny
    # per-step DMAs; small batches never pay for tile padding.
    B128 = _round_up(max(B, 1), LANE)
    tb = max(LANE, (min(int(tb), B128) // LANE) * LANE)

    # v7x: split the batch grid across the two TensorCores (CORE_PARALLEL).
    # Probe-gated so v5e/v6e or older jax fall back to "arbitrary" semantics.
    use_cp = B128 >= 2 * LANE and _core_parallel_ok(
        kernel, n_rows, n_cols, n_in_p, n_act_p)
    if use_cp:
        tb = min(tb, _round_up(B128 // 2, LANE))
    pB = _round_up(max(B, 1), tb)
    grid_len = pB // tb
    if use_cp and grid_len % 2:
        pB += tb                      # even grid -> balanced work per core
        grid_len += 1
    semantics = pltpu.CORE_PARALLEL if (use_cp and grid_len >= 2) else "arbitrary"

    # Scoped-VMEM safety valve (v5e default is only 16 MiB): rough per-step
    # need = double-buffered x/out tiles + f32 intermediates & softplus temps.
    est = 4 * tb * (2 * (n_in_p + n_act_p) + 4 * (h1 + h2 + n_act_p))
    vmem_limit = (int(min(max(2 * est, 16 * 2**20), 64 * 2**20))
                  if est > 12 * 2**20 else None)

    # Pad features to a sublane multiple and the batch to the tile size; padded
    # rows/columns are zeros and are sliced off below.
    x_p = jnp.zeros((n_in_p, pB), jnp.float32).at[:n_in, :B].set(
        xT.astype(jnp.float32))

    call = _build_call(kernel, n_rows, n_cols, n_in_p, n_act_p, tb, pB,
                       semantics, vmem_limit)
    outT = call(x_p, P)                                    # [n_act_p, pB]
    return outT[:n_act, :B]


def actor_forward(x, params, *, tb=4096):
    """PyTorch-layout wrapper: x [B, n_inputs] -> logits [B, n_actions].

    # TODO(synk): if the surrounding RL pipeline can stay feature-major, call
    # actor_forward_feature_major directly and drop both transposes.
    """
    return actor_forward_feature_major(x.T, params, tb=tb).T


def init_params(key, n_inputs=4, n_actions=2):
    """Deterministic synthetic init (PyTorch-style uniform fan-in bounds);
    weights in nn.Linear layout [out_features, in_features], biases [out, 1]."""
    def linear(k, fan_in, fan_out):
        kw, kb = jax.random.split(k)
        bound = 1.0 / (fan_in ** 0.5)
        w = jax.random.uniform(kw, (fan_out, fan_in), jnp.float32, -bound, bound)
        b = jax.random.uniform(kb, (fan_out, 1), jnp.float32, -bound, bound)
        return w, b

    k1, k2, k3 = jax.random.split(key, 3)
    w1, b1 = linear(k1, n_inputs, 16)
    w2, b2 = linear(k2, 16, 8)
    w3, b3 = linear(k3, 8, n_actions)
    return {"w1": w1, "b1": b1, "w2": w2, "b2": b2, "w3": w3, "b3": b3}


def reference_forward(x, p):
    h = jax.nn.softplus(x @ p["w1"].T + p["b1"].T)
    h = jax.nn.softplus(h @ p["w2"].T + p["b2"].T)
    return h @ p["w3"].T + p["b3"].T


if __name__ == "__main__":
    key = jax.random.PRNGKey(0)
    k_param, k_small, k_big = jax.random.split(key, 3)

    n_inputs, n_actions = 4, 2
    params = init_params(k_param, n_inputs, n_actions)

    # MXU accumulation order differs slightly from the XLA reference dot.
    atol = rtol = 1e-4

    # Small (CartPole rollout-like) batch: one 128-lane tile, 1-step grid.
    obs = jax.random.normal(k_small, (8, n_inputs), dtype=jnp.float32)
    out = jax.block_until_ready(actor_forward(obs, params))
    ref = reference_forward(obs, params)
    assert out.shape == (8, n_actions)
    assert jnp.allclose(out, ref, atol=atol, rtol=rtol)

    # Larger ragged batch with the default large tile (single grid step on
    # single-core chips; two balanced steps under CORE_PARALLEL on v7x).
    obs_big = jax.random.normal(k_big, (1029, n_inputs), dtype=jnp.float32)
    out_big = jax.block_until_ready(actor_forward(obs_big, params))
    ref_big = reference_forward(obs_big, params)
    assert out_big.shape == (1029, n_actions)
    assert jnp.allclose(out_big, ref_big, atol=atol, rtol=rtol)

    # Small tile forces a multi-step batch grid and exercises the transpose-free
    # feature-major entry point directly.
    out_fm = jax.block_until_ready(
        actor_forward_feature_major(obs_big.T, params, tb=512))
    assert out_fm.shape == (n_actions, 1029)
    assert jnp.allclose(out_fm.T, ref_big, atol=atol, rtol=rtol)

    print("KERNEL_OK")
</pallas_src>

<mosaic_0001>
module attributes {stable_mosaic.version = 11 : i64} {
  func.func @kernel(%arg0: i32, %arg1: memref<8x128xf32, #tpu.memory_space<vmem>>, %arg2: memref<16x35xf32, #tpu.memory_space<vmem>>, %arg3: memref<8x128xf32, #tpu.memory_space<vmem>>) attributes {dimension_semantics = [#tpu.dimension_semantics<arbitrary>], iteration_bounds = array<i64: 1>, scalar_prefetch = 0 : i64, scratch_operands = 0 : i64, tpu.core_type = #tpu.core_type<tc>, window_params = [{transform_indices = @transform_0, window_bounds = array<i64: 8, 128>}, {pipeline_mode = #tpu.pipeline_mode<synchronous>, transform_indices = @transform_1, window_bounds = array<i64: 16, 35>}, {transform_indices = @transform_2, window_bounds = array<i64: 8, 128>}]} {
    %c0 = arith.constant 0 : index
    %c0_0 = arith.constant 0 : index
    %0 = vector.load %arg1[%c0, %c0_0] : memref<8x128xf32, #tpu.memory_space<vmem>>, vector<8x128xf32>
    %c0_1 = arith.constant 0 : index
    %c0_2 = arith.constant 0 : index
    %1 = vector.load %arg2[%c0_1, %c0_2] : memref<16x35xf32, #tpu.memory_space<vmem>>, vector<16x35xf32>
    %2 = vector.extract_strided_slice %1 {offsets = [0, 0], sizes = [16, 8], strides = [1, 1]} : vector<16x35xf32> to vector<16x8xf32>
    %3 = vector.extract_strided_slice %1 {offsets = [0, 8], sizes = [16, 1], strides = [1, 1]} : vector<16x35xf32> to vector<16x1xf32>
    %4 = vector.extract_strided_slice %1 {offsets = [0, 9], sizes = [8, 16], strides = [1, 1]} : vector<16x35xf32> to vector<8x16xf32>
    %5 = vector.extract_strided_slice %1 {offsets = [0, 25], sizes = [8, 1], strides = [1, 1]} : vector<16x35xf32> to vector<8x1xf32>
    %6 = vector.extract_strided_slice %1 {offsets = [0, 26], sizes = [8, 8], strides = [1, 1]} : vector<16x35xf32> to vector<8x8xf32>
    %7 = vector.extract_strided_slice %1 {offsets = [0, 34], sizes = [8, 1], strides = [1, 1]} : vector<16x35xf32> to vector<8x1xf32>
    %cst = arith.constant dense<0.000000e+00> : vector<16x128xf32>
    %8 = tpu.matmul %2, %0, %cst {dimension_numbers = #tpu.dot_dimension_numbers<[1], [0], [0], [1], [0, 0, 1, 1], [], []>} : vector<16x8xf32>, vector<8x128xf32>, vector<16x128xf32> -> vector<16x128xf32>
    %9 = vector.broadcast %3 : vector<16x1xf32> to vector<16x128xf32>
    %10 = arith.addf %8, %9 : vector<16x128xf32>
    %cst_3 = arith.constant 0.000000e+00 : f32
    %11 = vector.broadcast %cst_3 : f32 to vector<16x128xf32>
    %12 = arith.maximumf %10, %11 : vector<16x128xf32>
    %13 = math.absf %10 : vector<16x128xf32>
    %cst_4 = arith.constant 0.000000e+00 : f32
    %14 = vector.broadcast %cst_4 : f32 to vector<16x128xf32>
    %15 = arith.subf %14, %13 : vector<16x128xf32>
    %16 = math.exp %15 : vector<16x128xf32>
    %17 = math.log1p %16 : vector<16x128xf32>
    %18 = arith.addf %12, %17 : vector<16x128xf32>
    %cst_5 = arith.constant dense<0.000000e+00> : vector<8x128xf32>
    %19 = tpu.matmul %4, %18, %cst_5 {dimension_numbers = #tpu.dot_dimension_numbers<[1], [0], [0], [1], [0, 0, 1, 1], [], []>} : vector<8x16xf32>, vector<16x128xf32>, vector<8x128xf32> -> vector<8x128xf32>
    %20 = vector.broadcast %5 : vector<8x1xf32> to vector<8x128xf32>
    %21 = arith.addf %19, %20 : vector<8x128xf32>
    %cst_6 = arith.constant 0.000000e+00 : f32
    %22 = vector.broadcast %cst_6 : f32 to vector<8x128xf32>
    %23 = arith.maximumf %21, %22 : vector<8x128xf32>
    %24 = math.absf %21 : vector<8x128xf32>
    %cst_7 = arith.constant 0.000000e+00 : f32
    %25 = vector.broadcast %cst_7 : f32 to vector<8x128xf32>
    %26 = arith.subf %25, %24 : vector<8x128xf32>
    %27 = math.exp %26 : vector<8x128xf32>
    %28 = math.log1p %27 : vector<8x128xf32>
    %29 = arith.addf %23, %28 : vector<8x128xf32>
    %cst_8 = arith.constant dense<0.000000e+00> : vector<8x128xf32>
    %30 = tpu.matmul %6, %29, %cst_8 {dimension_numbers = #tpu.dot_dimension_numbers<[1], [0], [0], [1], [0, 0, 1, 1], [], []>} : vector<8x8xf32>, vector<8x128xf32>, vector<8x128xf32> -> vector<8x128xf32>
    %31 = vector.broadcast %7 : vector<8x1xf32> to vector<8x128xf32>
    %32 = arith.addf %30, %31 : vector<8x128xf32>
    %c0_9 = arith.constant 0 : index
    %c0_10 = arith.constant 0 : index
    %33 = vector.load %arg3[%c0_9, %c0_10] : memref<8x128xf32, #tpu.memory_space<vmem>>, vector<8x128xf32>
    tpu.vector_store %arg3[%c0_9, %c0_10], %32 {strides = array<i32>} : memref<8x128xf32, #tpu.memory_space<vmem>>, vector<8x128xf32>,
    return
  }
  func.func @transform_0(%arg0: i32) -> (i32, i32) {
    %c0_i32 = arith.constant 0 : i32
    %c0_i32_0 = arith.constant 0 : i32
    return %c0_i32, %arg0 : i32, i32
  }
  func.func @transform_1(%arg0: i32) -> (i32, i32) {
    %c0_i32 = arith.constant 0 : i32
    %c0_i32_0 = arith.constant 0 : i32
    %c0_i32_1 = arith.constant 0 : i32
    return %c0_i32, %c0_i32_0 : i32, i32
  }
  func.func @transform_2(%arg0: i32) -> (i32, i32) {
    %c0_i32 = arith.constant 0 : i32
    %c0_i32_0 = arith.constant 0 : i32
    return %c0_i32, %arg0 : i32, i32
  }
}

</mosaic_0001>

<llo_original>
// kernel: tpu_custom_call.1
$region0: #{tpu_custom_call.1}
  #allocation0 [shape = 'u32[]', space=smem, size = 0x4, offset = 0x4, fixed_abs, tag = 'smem constant byte address 0x4 - core index']
  #allocation1 [shape = 'u32[144,128]{1,0:T(1,128)}', space=vmem, size = 0x12000, scoped, tag = 'internal scratch']
  %s0 = inlined_call_operand.hbm [shape: f32[8,128], index: 0, kind: input, shape index: {}]
  %s1 = inlined_call_operand.hbm [shape: f32[16,35], index: 1, kind: input, shape index: {}]
  %s2 = inlined_call_operand.hbm [shape: f32[8,128], index: 2, kind: output, shape index: {}]
  %s3 = sld [smem:[#allocation0]]
  $region26: #{tpu_custom_call.1} parent=0
    _
  %s5 = ssub.s32 1, %s3
  %s6 = scalar_select 0, %s5, %s3
  $region1: #{tpu_custom_call.1} parent=0
    #allocation2 [shape = 'u8[4096]{0}', space=vmem, size = 0x1000, scoped, tag = 'input window, operand 0, single buffered']
    #allocation3 [shape = 's32[1]{0}', space=sflag, size = 0x4, scoped, tag = 'scoped memory for tpu_custom_call.1']
    #allocation4 [shape = 's32[1]{0}', space=sflag, size = 0x4, scoped, tag = 'scoped memory for tpu_custom_call.1']
    #allocation5 [shape = 'u8[8192]{0}', space=vmem, size = 0x2000, scoped, tag = 'input window, operand 1, single buffered']
    #allocation6 [shape = 's32[1]{0}', space=sflag, size = 0x4, scoped, tag = 'scoped memory for tpu_custom_call.1']
    #allocation7 [shape = 'u8[4096]{0}', space=vmem, size = 0x1000, scoped, tag = 'output window, operand 0, single buffered']
    %7 = vsyncpa [#allocation3], 0
    %8 = vsyncpa [#allocation6], 0
    %9 = vsyncpa [#allocation4], 0
    // Predicated region
    $region2: #{tpu_custom_call.1} parent=1 // pred_check
      _
    $region3: #{tpu_custom_call.1} parent=1 // pred_check_branch
      %11 = sbr.rel (0) target = $region5
    $region4: #{tpu_custom_call.1} parent=1 // pred_region
      %s13 = ssub.s32 128, 128
      %14 = vsyncadd [#allocation3], %s13
      %s16 = sshll.u32 [#allocation2], 4
      %s17 = int_to_ptr.vmem [resolvable:$true] %s16
      %19 = dma.hbm_to_vmem [thread:$0]  %s0, 128, %s17, [#allocation3]
    $region5: #{tpu_custom_call.1} parent=1 // pred_fallthru
      _
    // Predicated region
    $region6: #{tpu_custom_call.1} parent=1 // pred_check
      _
    $region7: #{tpu_custom_call.1} parent=1 // pred_check_branch
      %21 = sbr.rel (0) target = $region9
    $region8: #{tpu_custom_call.1} parent=1 // pred_region
      %s23 = ssub.s32 256, 256
      %24 = vsyncadd [#allocation6], %s23
      %s25 = sshll.u32 [#allocation5], 4
      %s26 = int_to_ptr.vmem [resolvable:$true] %s25
      %31 = dma.hbm_to_vmem [thread:$0]  %s1, 256, %s26, [#allocation6], 128, 128, 8
    $region9: #{tpu_custom_call.1} parent=1 // pred_fallthru
      _
    // Predicated region
    $region10: #{tpu_custom_call.1} parent=1 // pred_check
      _
    $region11: #{tpu_custom_call.1} parent=1 // pred_check_branch
      %33 = sbr.rel (0) target = $region13
    $region12: #{tpu_custom_call.1} parent=1 // pred_region
      %34 = dma.done [#allocation3], 128
    $region13: #{tpu_custom_call.1} parent=1 // pred_fallthru
      _
    // Predicated region
    $region14: #{tpu_custom_call.1} parent=1 // pred_check
      _
    $region15: #{tpu_custom_call.1} parent=1 // pred_check_branch
      %36 = sbr.rel (0) target = $region17
    $region16: #{tpu_custom_call.1} parent=1 // pred_region
      %37 = dma.done [#allocation6], 256
    $region17: #{tpu_custom_call.1} parent=1 // pred_fallthru
      _
    %v38 = vld [vmem:[#allocation2] sm:$0xff]
    %v39 = vld [vmem:[#allocation5] sm:$0xff]
    %v40 = vld [vmem:[#allocation5 + $0x8] sm:$0xff]
    %42 = vset.pattern.permute.xlu0 8
    %43 = vperm.xlu0 %42, %v39
    %v44 = vpop.permute.xlu0 %43
    %47 = vset.pattern.permute.xlu0 8
    %48 = vperm.xlu0 %47, %v40
    %v49 = vpop.permute.xlu0 %48
    %vm51 = vcmask 64512
    %v52 = vsel %vm51, %v39, 0
    %v54 = vsel %vm51, %v40, 0
    %56 = vmatprep.subr.mxu0 0.0
    %57 = vmatpush1.msra.mxu0 %v38
    %58 = vmatprep.subr.mxu0 0.0
    %59 = vmatpush1.msra.mxu0 0.0
    %60 = vmatprep.subr.mxu0 0.0
    %61 = vmatpush1.msra.mxu0 0.0
    %62 = vmatprep.subr.mxu0 0.0
    %63 = vmatpush1.msra.mxu0 0.0
    %64 = vmatprep.subr.mxu0 0.0
    %65 = vmatpush1.msra.mxu0 0.0
    %66 = vmatprep.subr.mxu0 0.0
    %67 = vmatpush1.msra.mxu0 0.0
    %68 = vmatprep.subr.mxu0 0.0
    %69 = vmatpush1.msra.mxu0 0.0
    %70 = vmatprep.subr.mxu0 0.0
    %71 = vmatpush1.msra.mxu0 0.0
    %72 = vmatprep.subr.mxu0 0.0
    %73 = vmatpush1.msra.mxu0 0.0
    %74 = vmatprep.subr.mxu0 0.0
    %75 = vmatpush1.msra.mxu0 0.0
    %76 = vmatprep.subr.mxu0 0.0
    %77 = vmatpush1.msra.mxu0 0.0
    %78 = vmatprep.subr.mxu0 0.0
    %79 = vmatpush1.msra.mxu0 0.0
    %80 = vmatprep.subr.mxu0 0.0
    %81 = vmatpush1.msra.mxu0 0.0
    %82 = vmatprep.subr.mxu0 0.0
    %83 = vmatpush1.msra.mxu0 0.0
    %84 = vmatprep.subr.mxu0 0.0
    %85 = vmatpush1.msra.mxu0 0.0
    %86 = vmatprep.subr.mxu0 0.0
    %87 = vmatpush1.msra.mxu0 0.0
    %88 = vmatprep.subr.mxu0 0.0
    %89 = vmatpush1.msra.mxu0 0.0
    %90 = vmatprep.subr.mxu0 0.0
    %91 = vmatpush1.msra.mxu0 0.0
    %92 = vmatprep.subr.mxu0 0.0
    %93 = vmatpush1.msra.mxu0 0.0
    %94 = vmatprep.subr.mxu0 0.0
    %95 = vmatpush1.msra.mxu0 0.0
    %96 = vmatprep.subr.mxu0 0.0
    %97 = vmatpush1.msra.mxu0 0.0
    %98 = vmatprep.subr.mxu0 0.0
    %99 = vmatpush1.msra.mxu0 0.0
    %100 = vmatprep.subr.mxu0 0.0
    %101 = vmatpush1.msra.mxu0 0.0
    %102 = vmatprep.subr.mxu0 0.0
    %103 = vmatpush1.msra.mxu0 0.0
    %104 = vmatprep.subr.mxu0 0.0
    %105 = vmatpush1.msra.mxu0 0.0
    %106 = vmatprep.subr.mxu0 0.0
    %107 = vmatpush1.msra.mxu0 0.0
    %108 = vmatprep.subr.mxu0 0.0
    %109 = vmatpush1.msra.mxu0 0.0
    %110 = vmatprep.subr.mxu0 0.0
    %111 = vmatpush1.msra.mxu0 0.0
    %112 = vmatprep.subr.mxu0 0.0
    %113 = vmatpush1.msra.mxu0 0.0
    %114 = vmatprep.subr.mxu0 0.0
    %115 = vmatpush1.msra.mxu0 0.0
    %116 = vmatprep.subr.mxu0 0.0
    %117 = vmatpush1.msra.mxu0 0.0
    %118 = vmatprep.subr.mxu0 0.0
    %119 = vmatpush1.msra.mxu0 0.0
    %120 = vmatprep.mubr.f32.mxu0 0.0
    %121 = vmatmul.mubr.f32.gmra.mrb[0].mxu0 %v52
    %v122 = vpop.f32.mrb[0].mxu0
    %v123 = vadd.f32 %v44, %v122
    %v124 = vpop.f32.mrb[0].mxu0
    %125 = vmatprep.mubr.f32.mxu0 0.0
    %126 = vmatmul.mubr.f32.gmra.mrb[0].mxu0 %v54
    %v127 = vpop.f32.mrb[0].mxu0
    %v128 = vadd.f32 %v49, %v127
    %v129 = vpop.f32.mrb[0].mxu0
    %130 = vdwg.mxu0
    %v131 = vmax.f32 %v123, 0.0
    %v132 = vmax.f32 %v128, 0.0
    %v133 = vand.u32 2147483647, %v123
    %v134 = vand.u32 2147483647, %v128
    %v135 = vsub.f32 0.0, %v133
    %v136 = vsub.f32 0.0, %v134
    %v137 = vmul.f32 %v135, 1.442695
    %v138 = vpow.pop %v137
    %v139 = vmul.f32 %v136, 1.442695
    %v140 = vpow.pop %v139
    %v141 = vadd.f32 %v138, 1.0
    %v142 = vlog2.pop %v141
    %v143 = vmul.f32 %v142, 0.6931472
    %v144 = vmul.f32 -0.5, %v138
    %v145 = vadd.f32 %v144, 1.0
    %v146 = vmul.f32 %v145, %v138
    %v147 = vand.u32 2147483647, %v138
    %vm148 = vcmp.lt.f32.partialorder %v147, 0.0004427343
    %v149 = vsel %vm148, %v146, %v143
    %v150 = vadd.f32 %v140, 1.0
    %v151 = vlog2.pop %v150
    %v152 = vmul.f32 %v151, 0.6931472
    %v153 = vmul.f32 -0.5, %v140
    %v154 = vadd.f32 %v153, 1.0
    %v155 = vmul.f32 %v154, %v140
    %v156 = vand.u32 2147483647, %v140
    %vm157 = vcmp.lt.f32.partialorder %v156, 0.0004427343
    %v158 = vsel %vm157, %v155, %v152
    %v159 = vadd.f32 %v131, %v149
    %v160 = vadd.f32 %v132, %v158
    %161 = vset.pattern.permute.xlu0 25
    %162 = vperm.xlu0 %161, %v39
    %v163 = vpop.permute.xlu0 %162
    %165 = vrot.lane.b32.xlu0 %v39, 119
    %v166 = vpop.permute.xlu0 %165
    %vm167 = vcmask 130048
    %v168 = vsel %vm167, %v166, 0
    %170 = vmatprep.subr.mxu0 0.0
    %171 = vmatpush1.msra.mxu0 %v159
    %172 = vmatprep.subr.mxu0 0.0
    %173 = vmatpush1.msra.mxu0 %v160
    %174 = vmatprep.subr.mxu0 0.0
    %175 = vmatpush1.msra.mxu0 0.0
    %176 = vmatprep.subr.mxu0 0.0
    %177 = vmatpush1.msra.mxu0 0.0
    %178 = vmatprep.subr.mxu0 0.0
    %179 = vmatpush1.msra.mxu0 0.0
    %180 = vmatprep.subr.mxu0 0.0
    %181 = vmatpush1.msra.mxu0 0.0
    %182 = vmatprep.subr.mxu0 0.0
    %183 = vmatpush1.msra.mxu0 0.0
    %184 = vmatprep.subr.mxu0 0.0
    %185 = vmatpush1.msra.mxu0 0.0
    %186 = vmatprep.subr.mxu0 0.0
    %187 = vmatpush1.msra.mxu0 0.0
    %188 = vmatprep.subr.mxu0 0.0
    %189 = vmatpush1.msra.mxu0 0.0
    %190 = vmatprep.subr.mxu0 0.0
    %191 = vmatpush1.msra.mxu0 0.0
    %192 = vmatprep.subr.mxu0 0.0
    %193 = vmatpush1.msra.mxu0 0.0
    %194 = vmatprep.subr.mxu0 0.0
    %195 = vmatpush1.msra.mxu0 0.0
    %196 = vmatprep.subr.mxu0 0.0
    %197 = vmatpush1.msra.mxu0 0.0
    %198 = vmatprep.subr.mxu0 0.0
    %199 = vmatpush1.msra.mxu0 0.0
    %200 = vmatprep.subr.mxu0 0.0
    %201 = vmatpush1.msra.mxu0 0.0
    %202 = vmatprep.subr.mxu0 0.0
    %203 = vmatpush1.msra.mxu0 0.0
    %204 = vmatprep.subr.mxu0 0.0
    %205 = vmatpush1.msra.mxu0 0.0
    %206 = vmatprep.subr.mxu0 0.0
    %207 = vmatpush1.msra.mxu0 0.0
    %208 = vmatprep.subr.mxu0 0.0
    %209 = vmatpush1.msra.mxu0 0.0
    %210 = vmatprep.subr.mxu0 0.0
    %211 = vmatpush1.msra.mxu0 0.0
    %212 = vmatprep.subr.mxu0 0.0
    %213 = vmatpush1.msra.mxu0 0.0
    %214 = vmatprep.subr.mxu0 0.0
    %215 = vmatpush1.msra.mxu0 0.0
    %216 = vmatprep.subr.mxu0 0.0
    %217 = vmatpush1.msra.mxu0 0.0
    %218 = vmatprep.subr.mxu0 0.0
    %219 = vmatpush1.msra.mxu0 0.0
    %220 = vmatprep.subr.mxu0 0.0
    %221 = vmatpush1.msra.mxu0 0.0
    %222 = vmatprep.subr.mxu0 0.0
    %223 = vmatpush1.msra.mxu0 0.0
    %224 = vmatprep.subr.mxu0 0.0
    %225 = vmatpush1.msra.mxu0 0.0
    %226 = vmatprep.subr.mxu0 0.0
    %227 = vmatpush1.msra.mxu0 0.0
    %228 = vmatprep.subr.mxu0 0.0
    %229 = vmatpush1.msra.mxu0 0.0
    %230 = vmatprep.subr.mxu0 0.0
    %231 = vmatpush1.msra.mxu0 0.0
    %232 = vmatprep.subr.mxu0 0.0
    %233 = vmatpush1.msra.mxu0 0.0
    %234 = vmatprep.mubr.f32.mxu0 0.0
    %235 = vmatmul.mubr.f32.gmra.mrb[0].mxu0 %v168
    %v236 = vpop.f32.mrb[0].mxu0
    %v237 = vadd.f32 %v163, %v236
    %v238 = vpop.f32.mrb[0].mxu0
    %239 = vdwg.mxu0
    %v240 = vmax.f32 %v237, 0.0
    %v241 = vand.u32 2147483647, %v237
    %v242 = vsub.f32 0.0, %v241
    %v243 = vmul.f32 %v242, 1.442695
    %v244 = vpow.pop %v243
    %v245 = vadd.f32 %v244, 1.0
    %v246 = vlog2.pop %v245
    %v247 = vmul.f32 %v246, 0.6931472
    %v248 = vmul.f32 -0.5, %v244
    %v249 = vadd.f32 %v248, 1.0
    %v250 = vmul.f32 %v249, %v244
    %v251 = vand.u32 2147483647, %v244
    %vm252 = vcmp.lt.f32.partialorder %v251, 0.0004427343
    %v253 = vsel %vm252, %v250, %v247
    %v254 = vadd.f32 %v240, %v253
    %255 = vset.pattern.permute.xlu0 34
    %256 = vperm.xlu0 %255, %v39
    %v257 = vpop.permute.xlu0 %256
    %259 = vrot.lane.b32.xlu0 %v39, 102
    %v260 = vpop.permute.xlu0 %259
    %v261 = vsel %vm51, %v260, 0
    %263 = vmatprep.subr.mxu0 0.0
    %264 = vmatpush1.msra.mxu0 %v254
    %265 = vmatprep.subr.mxu0 0.0
    %266 = vmatpush1.msra.mxu0 0.0
    %267 = vmatprep.subr.mxu0 0.0
    %268 = vmatpush1.msra.mxu0 0.0
    %269 = vmatprep.subr.mxu0 0.0
    %270 = vmatpush1.msra.mxu0 0.0
    %271 = vmatprep.subr.mxu0 0.0
    %272 = vmatpush1.msra.mxu0 0.0
    %273 = vmatprep.subr.mxu0 0.0
    %274 = vmatpush1.msra.mxu0 0.0
    %275 = vmatprep.subr.mxu0 0.0
    %276 = vmatpush1.msra.mxu0 0.0
    %277 = vmatprep.subr.mxu0 0.0
    %278 = vmatpush1.msra.mxu0 0.0
    %279 = vmatprep.subr.mxu0 0.0
    %280 = vmatpush1.msra.mxu0 0.0
    %281 = vmatprep.subr.mxu0 0.0
    %282 = vmatpush1.msra.mxu0 0.0
    %283 = vmatprep.subr.mxu0 0.0
    %284 = vmatpush1.msra.mxu0 0.0
    %285 = vmatprep.subr.mxu0 0.0
    %286 = vmatpush1.msra.mxu0 0.0
    %287 = vmatprep.subr.mxu0 0.0
    %288 = vmatpush1.msra.mxu0 0.0
    %289 = vmatprep.subr.mxu0 0.0
    %290 = vmatpush1.msra.mxu0 0.0
    %291 = vmatprep.subr.mxu0 0.0
    %292 = vmatpush1.msra.mxu0 0.0
    %293 = vmatprep.subr.mxu0 0.0
    %294 = vmatpush1.msra.mxu0 0.0
    %295 = vmatprep.subr.mxu0 0.0
    %296 = vmatpush1.msra.mxu0 0.0
    %297 = vmatprep.subr.mxu0 0.0
    %298 = vmatpush1.msra.mxu0 0.0
    %299 = vmatprep.subr.mxu0 0.0
    %300 = vmatpush1.msra.mxu0 0.0
    %301 = vmatprep.subr.mxu0 0.0
    %302 = vmatpush1.msra.mxu0 0.0
    %303 = vmatprep.subr.mxu0 0.0
    %304 = vmatpush1.msra.mxu0 0.0
    %305 = vmatprep.subr.mxu0 0.0
    %306 = vmatpush1.msra.mxu0 0.0
    %307 = vmatprep.subr.mxu0 0.0
    %308 = vmatpush1.msra.mxu0 0.0
    %309 = vmatprep.subr.mxu0 0.0
    %310 = vmatpush1.msra.mxu0 0.0
    %311 = vmatprep.subr.mxu0 0.0
    %312 = vmatpush1.msra.mxu0 0.0
    %313 = vmatprep.subr.mxu0 0.0
    %314 = vmatpush1.msra.mxu0 0.0
    %315 = vmatprep.subr.mxu0 0.0
    %316 = vmatpush1.msra.mxu0 0.0
    %317 = vmatprep.subr.mxu0 0.0
    %318 = vmatpush1.msra.mxu0 0.0
    %319 = vmatprep.subr.mxu0 0.0
    %320 = vmatpush1.msra.mxu0 0.0
    %321 = vmatprep.subr.mxu0 0.0
    %322 = vmatpush1.msra.mxu0 0.0
    %323 = vmatprep.subr.mxu0 0.0
    %324 = vmatpush1.msra.mxu0 0.0
    %325 = vmatprep.subr.mxu0 0.0
    %326 = vmatpush1.msra.mxu0 0.0
    %327 = vmatprep.mubr.f32.mxu0 0.0
    %328 = vmatmul.mubr.f32.gmra.mrb[0].mxu0 %v261
    %v329 = vpop.f32.mrb[0].mxu0
    %v330 = vadd.f32 %v257, %v329
    %v331 = vpop.f32.mrb[0].mxu0
    %332 = vdwg.mxu0
    %333 = vst [vmem:[#allocation7] sm:$0xff] %v330
    // Predicated region
    $region18: #{tpu_custom_call.1} parent=1 // pred_check
      _
    $region19: #{tpu_custom_call.1} parent=1 // pred_check_branch
      %335 = sbr.rel (0) target = $region21
    $region20: #{tpu_custom_call.1} parent=1 // pred_region
      %s337 = ssub.s32 128, 128
      %338 = vsyncadd [#allocation4], %s337
      %s340 = sshll.u32 [#allocation7], 4
      %s341 = int_to_ptr.vmem [resolvable:$true] %s340
      %343 = dma.vmem_to_hbm [thread:$0]  %s341, 128, %s2, [#allocation4]
    $region21: #{tpu_custom_call.1} parent=1 // pred_fallthru
      _
    // Predicated region
    $region22: #{tpu_custom_call.1} parent=1 // pred_check
      _
    $region23: #{tpu_custom_call.1} parent=1 // pred_check_branch
      %345 = sbr.rel (0) target = $region25
    $region24: #{tpu_custom_call.1} parent=1 // pred_region
      %346 = dma.done [#allocation4], 128
    $region25: #{tpu_custom_call.1} parent=1 // pred_fallthru
      _
    %347 = vsyncpa [#allocation3], 1
    %348 = vsyncpa [#allocation6], 1
    %349 = vsyncpa [#allocation4], 1

</llo_original>
